<compile_context>
chip_gen: v5e
topology: v5e:2x2
jax: 0.10.0
libtpu: 0.0.40
codegen_flags: <defaults>
</compile_context>

<pallas_src>
import functools

import jax
import jax.numpy as jnp
from jax.experimental import pallas as pl
from jax.experimental.pallas import tpu as pltpu


def _round_up(x, m):
    return (x + m - 1) // m * m


# ----------------------------- Pallas kernel --------------------------------
def _vit_encoder_kernel(tok_ref, wc_ref, c_ref, out_ref):
    # tok_ref: (TM, K)     bf16 im2col patch rows (streamed, double-buffered)
    # wc_ref : (K, F)      bf16 fused weight W1 @ W2 (constant index -> resident)
    # c_ref  : (N_pad, F)  f32 fused per-patch bias (b1 + pos) @ W2 + b2 (resident)
    # out_ref: (TM, F)     f32, last dim = full feature dim (no pad writeback)
    tm = tok_ref.shape[0]
    i = pl.program_id(1)                       # row-tile index within the batch
    acc = jnp.dot(tok_ref[...], wc_ref[...], preferred_element_type=jnp.float32)
    off = pl.multiple_of(i * tm, 8)            # tm is a multiple of 16
    out_ref[...] = (acc + c_ref[pl.ds(off, tm), :]).astype(out_ref.dtype)


def _pallas_encoder(tokens, wc, c, *, tm):
    B, Np, K = tokens.shape
    F = wc.shape[1]
    assert Np % tm == 0 and tm % 16 == 0 and c.shape == (Np, F)

    # Double-buffered streamed tiles + resident weight/bias (conservatively
    # counted as double-buffered too) must fit the 32 MiB scoped VMEM budget.
    vmem_needed = 2 * (tm * K * 2 + tm * F * 4 + K * F * 2 + Np * F * 4)
    assert vmem_needed < 32 * 1024 * 1024, vmem_needed

    grid = (B, Np // tm)
    return pl.pallas_call(
        _vit_encoder_kernel,
        out_shape=jax.ShapeDtypeStruct((B, Np, F), jnp.float32),
        grid_spec=pltpu.PrefetchScalarGridSpec(
            num_scalar_prefetch=0,
            grid=grid,
            in_specs=[
                # tokens: one (tm, K) row tile per step, streamed
                pl.BlockSpec((None, tm, K), lambda b, i: (b, i, 0)),
                # fused weight: constant block index -> fetched once, resident.
                # TODO(synk): pipeline_mode=pl.Buffered(1) would drop its second
                # buffer; only worth it once K*F reaches multi-MB.
                pl.BlockSpec((K, F), lambda b, i: (0, 0)),
                # fused per-patch bias: constant block index -> resident in
                # VMEM, sliced in-kernel (no per-step / per-batch re-DMA)
                pl.BlockSpec((Np, F), lambda b, i: (0, 0)),
            ],
            out_specs=pl.BlockSpec((None, tm, F), lambda b, i: (b, i, 0)),
        ),
        compiler_params=pltpu.CompilerParams(
            # Both axes are independent; lets the runtime split them across
            # v7x's two TensorCores.  (If xprof ever shows one TC idle, switch
            # the row axis to pltpu.CORE_PARALLEL.)
            dimension_semantics=("parallel", "parallel"),
            # 32 MiB scoped VMEM is safe on every generation (v7x physical is
            # 64 MiB); raise only on v5e/v6e if larger tiles ever need it.
            vmem_limit_bytes=32 * 1024 * 1024,
        ),
    )(tokens, wc, c)


# ------------------------------ tile selection -------------------------------
def _max_row_tile():
    """MXU rows per pass: 128 on v5e (4x128x128), 256 on v6e/v7x (2x256x256)."""
    try:
        kind = jax.devices()[0].device_kind.lower()
    except Exception:  # pragma: no cover - be safe if device query fails
        return 256
    if "v5 lite" in kind or "v5e" in kind or "v5litepod" in kind:
        return 128
    return 256


def _pick_row_tile(num_patches, batch, max_tm):
    """Row tile: multiple of 16 (bf16 sublane packing), as close to the MXU row
    width as the per-batch token count allows.  The patch axis is padded up to
    a multiple of tm, so ANY num_patches works (196, 49, ...)."""
    tm = min(max_tm, _round_up(num_patches, 16))
    # Prefer >= 2 total grid steps (pipeline steady state / v7x 2-TC split)
    # whenever shrinking the tile costs no extra padded rows.
    while (batch * (_round_up(num_patches, tm) // tm) < 2
           and tm % 32 == 0
           and _round_up(num_patches, tm // 2) == _round_up(num_patches, tm)):
        tm //= 2
    return tm


# ------------------------------ JAX wrapper ----------------------------------
def vit_encoder_forward(x1, x2, params, *, patch_size):
    """x1: (B, C-1, H, W), x2: (B, H, W)  ->  (B, num_patches, feature)."""
    x = jnp.concatenate([x1, x2[:, None, :, :]], axis=1)   # (B, C, H, W) NCHW
    B, C, H, W = x.shape
    p = patch_size
    Gh, Gw = H // p, W // p
    N = Gh * Gw
    K = C * p * p
    F = params["w2"].shape[1]

    # im2col for the kernel=stride=patch conv (exactly reproduces
    # Conv2d(...).flatten(2).transpose(1,2) token ordering).  Left in XLA: at
    # these sizes it is a single fusion feeding the kernel.
    tokens = (
        x.reshape(B, C, Gh, p, Gw, p)
        .transpose(0, 2, 4, 1, 3, 5)            # (B, Gh, Gw, C, p, p)
        .reshape(B, N, K)
        .astype(jnp.bfloat16)
    )

    # Algebraic fusion (dropout p=0 => exact):
    #   out = tok @ (W1 @ W2) + ((b1 + pos) @ W2 + b2)
    # Note: rounding W1@W2 to bf16 sums over E terms before rounding, so the
    # result can drift slightly from the unfused f32 module (checked below).
    wc = jnp.dot(params["w1"], params["w2"]).astype(jnp.bfloat16)                 # (K, F)
    c = jnp.dot(params["b1"] + params["pos_embed"], params["w2"]) + params["b2"]  # (N, F)
    c = c.astype(jnp.float32)

    tm = _pick_row_tile(N, B, _max_row_tile())
    N_pad = _round_up(N, tm)
    if N_pad != N:
        tokens = jnp.pad(tokens, ((0, 0), (0, N_pad - N), (0, 0)))
        c = jnp.pad(c, ((0, N_pad - N), (0, 0)))

    out = _pallas_encoder(tokens, wc, c, tm=tm)
    if N_pad != N:
        out = out[:, :N, :]
    return out


# ------------------------- deterministic param init --------------------------
def init_params(key, *, in_c, patch_size, embed_dim, feature, num_patches):
    k1, k2, k3 = jax.random.split(key, 3)
    K = in_c * patch_size * patch_size
    # Conv2d weight: kaiming_normal(mode='fan_out') ~ N(0, sqrt(2/fan_out)),
    # fan_out = embed_dim * k * k.  Bias = 0.  (synthetic deterministic init)
    fan_out = embed_dim * patch_size * patch_size
    conv_w = jax.random.normal(k1, (embed_dim, in_c, patch_size, patch_size),
                               jnp.float32) * jnp.sqrt(2.0 / fan_out)
    # Reshape to (C*p*p, E) matching im2col (c, ph, pw) ordering.
    w1 = conv_w.reshape(embed_dim, K).T
    b1 = jnp.zeros((1, embed_dim), jnp.float32)
    # pos_embed: trunc_normal std=0.02 (approximated with normal, deterministic)
    pos_embed = jax.random.normal(k2, (num_patches, embed_dim), jnp.float32) * 0.02
    # head Linear: trunc_normal std=0.01, bias 0.  Stored as (E, F) = weight.T
    w2 = jax.random.normal(k3, (embed_dim, feature), jnp.float32) * 0.01
    b2 = jnp.zeros((1, feature), jnp.float32)
    return dict(w1=w1, b1=b1, pos_embed=pos_embed, w2=w2, b2=b2)


# --------------------------- run + correctness check -------------------------
def _run_and_check(key, *, batch, in_c, hw, patch, embed, feature):
    kx1, kx2, kp = jax.random.split(key, 3)
    x1 = jax.random.normal(kx1, (batch, in_c - 1, hw, hw), jnp.float32)
    x2 = jax.random.normal(kx2, (batch, hw, hw), jnp.float32)
    gh = gw = hw // patch
    n = gh * gw
    params = init_params(kp, in_c=in_c, patch_size=patch, embed_dim=embed,
                         feature=feature, num_patches=n)

    fwd = jax.jit(functools.partial(vit_encoder_forward, patch_size=patch))
    out = jax.block_until_ready(fwd(x1, x2, params))
    assert out.shape == (batch, n, feature), out.shape

    # ------------------------------ references -------------------------------
    x = jnp.concatenate([x1, x2[:, None]], axis=1)
    k = in_c * patch * patch
    tok = (x.reshape(batch, in_c, gh, patch, gw, patch)
             .transpose(0, 2, 4, 1, 3, 5)
             .reshape(batch * n, k))

    # (a) exact mirror of the kernel math (bf16-rounded operands, f32 accumulate)
    wc_ref = (params["w1"] @ params["w2"]).astype(jnp.bfloat16).astype(jnp.float32)
    c_ref = (params["b1"] + params["pos_embed"]) @ params["w2"] + params["b2"]
    tok_b = tok.astype(jnp.bfloat16).astype(jnp.float32)
    ref_mirror = (tok_b @ wc_ref).reshape(batch, n, feature) + c_ref[None]
    assert jnp.allclose(out, ref_mirror, atol=1e-4, rtol=1e-3), \
        float(jnp.max(jnp.abs(out - ref_mirror)))

    # (b) full-f32 unfused module semantics (two matmuls), loose tol for bf16
    h = (tok @ params["w1"] + params["b1"]).reshape(batch, n, embed) \
        + params["pos_embed"][None]
    ref_full = h @ params["w2"] + params["b2"]
    assert jnp.allclose(out, ref_full, atol=2e-3, rtol=2e-2), \
        float(jnp.max(jnp.abs(out - ref_full)))


# ----------------------------------- main ------------------------------------
if __name__ == "__main__":
    key = jax.random.PRNGKey(0)
    k_small, k_big = jax.random.split(key, 2)

    # Small config consistent with the module (in_c = 4: 3-channel x1 + x2).
    _run_and_check(k_small, batch=2, in_c=4, hw=32, patch=8, embed=32, feature=16)

    # Slightly larger config: num_patches = 324 (not a multiple of the tile),
    # exercising the patch-axis padding, multi-tile bias slicing (i > 0) and
    # the wrapper's padded-row drop on every TPU generation.
    _run_and_check(k_big, batch=1, in_c=4, hw=144, patch=8, embed=32, feature=16)

    print("KERNEL_OK")
</pallas_src>

<mosaic_0001>
module attributes {stable_mosaic.version = 11 : i64} {
  func.func @_vit_encoder_kernel(%arg0: i32, %arg1: i32, %arg2: memref<1x16x256xbf16, #tpu.memory_space<vmem>>, %arg3: memref<256x16xbf16, #tpu.memory_space<vmem>>, %arg4: memref<16x16xf32, #tpu.memory_space<vmem>>, %arg5: memref<1x16x16xf32, #tpu.memory_space<vmem>>) attributes {dimension_semantics = [#tpu.dimension_semantics<parallel>, #tpu.dimension_semantics<parallel>], iteration_bounds = array<i64: 2, 1>, scalar_prefetch = 0 : i64, scratch_operands = 0 : i64, tpu.core_type = #tpu.core_type<tc>, window_params = [{transform_indices = @transform_0, window_bounds = array<i64: 1, 16, 256>}, {pipeline_mode = #tpu.pipeline_mode<synchronous>, transform_indices = @transform_1, window_bounds = array<i64: 256, 16>}, {pipeline_mode = #tpu.pipeline_mode<synchronous>, transform_indices = @transform_2, window_bounds = array<i64: 16, 16>}, {transform_indices = @transform_3, window_bounds = array<i64: 1, 16, 16>}]} {
    %c0 = arith.constant 0 : index
    %c0_0 = arith.constant 0 : index
    %c0_1 = arith.constant 0 : index
    %0 = vector.load %arg2[%c0, %c0_0, %c0_1] : memref<1x16x256xbf16, #tpu.memory_space<vmem>>, vector<1x16x256xbf16>
    %1 = vector.shape_cast %0 : vector<1x16x256xbf16> to vector<16x256xbf16>
    %c0_2 = arith.constant 0 : index
    %c0_3 = arith.constant 0 : index
    %2 = vector.load %arg3[%c0_2, %c0_3] : memref<256x16xbf16, #tpu.memory_space<vmem>>, vector<256x16xbf16>
    %cst = arith.constant dense<0.000000e+00> : vector<16x16xf32>
    %3 = tpu.matmul %1, %2, %cst {dimension_numbers = #tpu.dot_dimension_numbers<[1], [0], [0], [1], [0, 0, 1, 1], [], []>} : vector<16x256xbf16>, vector<256x16xbf16>, vector<16x16xf32> -> vector<16x16xf32>
    %c16_i32 = arith.constant 16 : i32
    %4 = arith.muli %arg1, %c16_i32 : i32
    %5 = tpu.assume_multiple %4, 8 : i32
    %6 = arith.index_cast %5 : i32 to index
    %c0_4 = arith.constant 0 : index
    %7 = vector.load %arg4[%6, %c0_4] : memref<16x16xf32, #tpu.memory_space<vmem>>, vector<16x16xf32>
    %8 = arith.addf %3, %7 : vector<16x16xf32>
    %c0_5 = arith.constant 0 : index
    %c0_6 = arith.constant 0 : index
    %c0_7 = arith.constant 0 : index
    %9 = vector.load %arg5[%c0_5, %c0_6, %c0_7] : memref<1x16x16xf32, #tpu.memory_space<vmem>>, vector<1x16x16xf32>
    %10 = vector.shape_cast %9 : vector<1x16x16xf32> to vector<16x16xf32>
    %11 = vector.shape_cast %8 : vector<16x16xf32> to vector<1x16x16xf32>
    tpu.vector_store %arg5[%c0_5, %c0_6, %c0_7], %11 {strides = array<i32>} : memref<1x16x16xf32, #tpu.memory_space<vmem>>, vector<1x16x16xf32>,
    return
  }
  func.func @transform_0(%arg0: i32, %arg1: i32) -> (i32, i32, i32) {
    %c0_i32 = arith.constant 0 : i32
    %c0_i32_0 = arith.constant 0 : i32
    return %arg0, %arg1, %c0_i32 : i32, i32, i32
  }
  func.func @transform_1(%arg0: i32, %arg1: i32) -> (i32, i32) {
    %c0_i32 = arith.constant 0 : i32
    %c0_i32_0 = arith.constant 0 : i32
    %c0_i32_1 = arith.constant 0 : i32
    return %c0_i32, %c0_i32_0 : i32, i32
  }
  func.func @transform_2(%arg0: i32, %arg1: i32) -> (i32, i32) {
    %c0_i32 = arith.constant 0 : i32
    %c0_i32_0 = arith.constant 0 : i32
    %c0_i32_1 = arith.constant 0 : i32
    return %c0_i32, %c0_i32_0 : i32, i32
  }
  func.func @transform_3(%arg0: i32, %arg1: i32) -> (i32, i32, i32) {
    %c0_i32 = arith.constant 0 : i32
    %c0_i32_0 = arith.constant 0 : i32
    return %arg0, %arg1, %c0_i32 : i32, i32, i32
  }
}

</mosaic_0001>

<llo_original>
// kernel: vit_encoder_forward.1
$region0: #{vit_encoder_forward.1}
  #allocation0 [shape = 'u32[]', space=smem, size = 0x4, offset = 0x4, fixed_abs, tag = 'smem constant byte address 0x4 - core index']
  #allocation1 [shape = 'u32[72,128]{1,0:T(1,128)}', space=vmem, size = 0x9000, scoped, tag = 'internal scratch']
  %s0 = inlined_call_operand.vmem [shape: bf16[2,16,256], index: 0, kind: input, shape index: {}]
  %s1 = inlined_call_operand.vmem [shape: bf16[256,16], index: 1, kind: input, shape index: {}]
  %s2 = inlined_call_operand.vmem [shape: f32[16,16], index: 2, kind: input, shape index: {}]
  %s3 = inlined_call_operand.hbm [shape: f32[2,16,16], index: 3, kind: output, shape index: {}]
  %s4 = sld [smem:[#allocation0]]
  $region45: #{vit_encoder_forward.1} parent=0
    _
  %s6 = ssub.s32 1, %s4
  %s7 = scalar_select 0, %s6, %s4
  $region1: #{vit_encoder_forward.1} parent=0
    #allocation2 [shape = 'u8[16384]{0}', space=vmem, size = 0x4000, scoped, tag = 'output window, operand 0']
    #allocation3 [shape = 's32[2]{0}', space=sflag, size = 0x8, scoped, tag = 'scoped memory for vit_encoder_forward.1']
    %8 = vsyncpa [#allocation3], 0
    %s9 = scalar_lea.sflag [#allocation3], 1
    %10 = vsyncpa %s9, 0
    loop: start=0, step=1, limit=4
    $region2: #{vit_encoder_forward.1} parent=1 // loop_pre_header
      _
    $region3: #{vit_encoder_forward.1} parent=1 // loop_header
      %s12 = sphi 0, %s16
      %p13 = scmp.ge.s32.totalorder %s12, 4
      %s19 = sphi 0, %s31
      %s20 = sphi 0, %s27
      %s21 = sphi 0, %s19
      %s22 = sphi 0, %s20
      %s23 = sphi 0, %s21
      %s24 = sphi 0, %s22
      %s36 = sphi 0, %s38
      %s39 = sphi 0, %s36
      %s40 = sphi 0, %s39
      %s56 = sphi 0, %s40
      %s60 = sphi 0, %s60
      %s62 = sphi 0, %s60
      %s63 = sphi 0, %s62
      %s77 = sphi 0, %s63
      %s81 = sphi 0, %s81
      %s83 = sphi 0, %s81
      %s84 = sphi 0, %s83
      %s98 = sphi 0, %s84
      %s106 = sphi 0, %s108
      %s109 = sphi 0, %s106
      %s110 = sphi 0, %s109
      %s126 = sphi 0, %s110
    $region4: #{vit_encoder_forward.1} parent=1 // loop_header_branch
      %15 = sbr.rel (%p13) target = $region8
    $region5: #{vit_encoder_forward.1} parent=1 // loop_body
      %s17 = ssub.s32 %s12, 1
      %s18 = ssub.s32 %s12, 2
      %s25 = sadd.s32 1, %s20
      %p26 = scmp.ge.s32.totalorder %s25, 1
      %s27 = scalar_select %p26, 0, %s25
      %s28 = sadd.s32 1, %s19
      %s29 = scalar_select %p26, %s28, %s19
      %p30 = scmp.ge.s32.totalorder %s29, 2
      %s31 = scalar_select %p30, 0, %s29
      %s32 = ssub.s32 %s19, %s31
      %s33 = ssub.s32 %s20, %s27
      %s34 = sor.u32 %s32, %s33
      %p35 = scmp.eq.s32.totalorder %s34, 0
      %s37 = sadd.s32 %s36, 1
      %s38 = scalar_select %p35, %s36, %s37
      %p41 = pneg %p35
      %p42 = scmp.eq.s32.totalorder %s12, 1
      %p43 = por %p41, %p42
      %p44 = scmp.ne.s32.totalorder %s36, %s39
      %p45 = scmp.eq.s32.totalorder %s12, 0
      %p46 = por %p44, %p45
      %p47 = scmp.ne.s32.totalorder %s36, %s39
      %p48 = scmp.eq.s32.totalorder %s17, 1
      %p49 = por %p47, %p48
      %p50 = scmp.ne.s32.totalorder %s39, %s40
      %p51 = scmp.eq.s32.totalorder %s17, 0
      %p52 = por %p50, %p51
      %p53 = scmp.ne.s32.totalorder %s39, %s40
      %p54 = scmp.eq.s32.totalorder %s18, 1
      %p55 = por %p53, %p54
      %p57 = scmp.ne.s32.totalorder %s40, %s56
      %p58 = scmp.eq.s32.totalorder %s18, 0
      %p59 = por %p57, %p58
      %s61 = sadd.s32 %s60, 1
      %p64 = scmp.eq.s32.totalorder %s12, 1
      %p65 = scmp.ne.s32.totalorder %s60, %s62
      %p66 = scmp.eq.s32.totalorder %s12, 0
      %p67 = por %p65, %p66
      %p68 = scmp.ne.s32.totalorder %s60, %s62
      %p69 = scmp.eq.s32.totalorder %s17, 1
      %p70 = por %p68, %p69
      %p71 = scmp.ne.s32.totalorder %s62, %s63
      %p72 = scmp.eq.s32.totalorder %s17, 0
      %p73 = por %p71, %p72
      %p74 = scmp.ne.s32.totalorder %s62, %s63
      %p75 = scmp.eq.s32.totalorder %s18, 1
      %p76 = por %p74, %p75
      %p78 = scmp.ne.s32.totalorder %s63, %s77
      %p79 = scmp.eq.s32.totalorder %s18, 0
      %p80 = por %p78, %p79
      %s82 = sadd.s32 %s81, 1
      %p85 = scmp.eq.s32.totalorder %s12, 1
      %p86 = scmp.ne.s32.totalorder %s81, %s83
      %p87 = scmp.eq.s32.totalorder %s12, 0
      %p88 = por %p86, %p87
      %p89 = scmp.ne.s32.totalorder %s81, %s83
      %p90 = scmp.eq.s32.totalorder %s17, 1
      %p91 = por %p89, %p90
      %p92 = scmp.ne.s32.totalorder %s83, %s84
      %p93 = scmp.eq.s32.totalorder %s17, 0
      %p94 = por %p92, %p93
      %p95 = scmp.ne.s32.totalorder %s83, %s84
      %p96 = scmp.eq.s32.totalorder %s18, 1
      %p97 = por %p95, %p96
      %p99 = scmp.ne.s32.totalorder %s84, %s98
      %p100 = scmp.eq.s32.totalorder %s18, 0
      %p101 = por %p99, %p100
      %s102 = ssub.s32 %s19, %s31
      %s103 = ssub.s32 %s20, %s27
      %s104 = sor.u32 %s102, %s103
      %p105 = scmp.eq.s32.totalorder %s104, 0
      %s107 = sadd.s32 %s106, 1
      %s108 = scalar_select %p105, %s106, %s107
      %p111 = pneg %p105
      %p112 = scmp.eq.s32.totalorder %s12, 1
      %p113 = por %p111, %p112
      %p114 = scmp.ne.s32.totalorder %s106, %s109
      %p115 = scmp.eq.s32.totalorder %s12, 0
      %p116 = por %p114, %p115
      %p117 = scmp.ne.s32.totalorder %s106, %s109
      %p118 = scmp.eq.s32.totalorder %s17, 1
      %p119 = por %p117, %p118
      %p120 = scmp.ne.s32.totalorder %s109, %s110
      %p121 = scmp.eq.s32.totalorder %s17, 0
      %p122 = por %p120, %p121
      %p123 = scmp.ne.s32.totalorder %s109, %s110
      %p124 = scmp.eq.s32.totalorder %s18, 1
      %p125 = por %p123, %p124
      %p127 = scmp.ne.s32.totalorder %s110, %s126
      %p128 = scmp.eq.s32.totalorder %s18, 0
      %p129 = por %p127, %p128
      %p130 = scmp.le.s32.totalorder 1, %s12
      %p131 = scmp.lt.s32.totalorder %s12, 3
      %p132 = pnand %p130, %p131
      %p133 = pneg %p132
      // Predicated region
      $region9: #{vit_encoder_forward.1} parent=5 // pred_check
        _
      $region10: #{vit_encoder_forward.1} parent=5 // pred_check_branch
        %135 = sbr.rel (%p132) target = $region12
      $region11: #{vit_encoder_forward.1} parent=5 // pred_region
        %s136 = ssub.s32 %s12, 1
        // Predicated region
        $region13: #{vit_encoder_forward.1} parent=11 // pred_check
          %p137 = pneg %p73
        $region14: #{vit_encoder_forward.1} parent=11 // pred_check_branch
          %139 = sbr.rel (%p137) target = $region16
        $region15: #{vit_encoder_forward.1} parent=11 // pred_region
          _
        $region16: #{vit_encoder_forward.1} parent=11 // pred_fallthru
          _
        // Predicated region
        $region17: #{vit_encoder_forward.1} parent=11 // pred_check
          %p140 = pneg %p94
        $region18: #{vit_encoder_forward.1} parent=11 // pred_check_branch
          %142 = sbr.rel (%p140) target = $region20
        $region19: #{vit_encoder_forward.1} parent=11 // pred_region
          _
        $region20: #{vit_encoder_forward.1} parent=11 // pred_fallthru
          _
      $region12: #{vit_encoder_forward.1} parent=5 // pred_fallthru
        _
      %p143 = scmp.lt.s32.totalorder %s12, 2
      // Predicated region
      $region21: #{vit_encoder_forward.1} parent=5 // pred_check
        %p144 = pneg %p143
      $region22: #{vit_encoder_forward.1} parent=5 // pred_check_branch
        %146 = sbr.rel (%p144) target = $region24
      $region23: #{vit_encoder_forward.1} parent=5 // pred_region
        // Predicated region
        $region25: #{vit_encoder_forward.1} parent=23 // pred_check
          %p147 = pneg %p46
        $region26: #{vit_encoder_forward.1} parent=23 // pred_check_branch
          %149 = sbr.rel (%p147) target = $region28
        $region27: #{vit_encoder_forward.1} parent=23 // pred_region
          %s150 = smul.u32 2, %s20
          %p151 = scmp.lt.s32.totalorder %s19, 1
          %s152 = scalar_select %p151, %s19, 1
          %p153 = scmp.lt.s32.totalorder %s150, 1
          %s154 = scalar_select %p153, %s150, 1
          %s155 = smul.addr %s154, 2
          %s156 = smul.addr %s152, 4
          %s157 = sadd.s32 %s155, %s156
          %s158 = smul.addr %s157, 4
          %s159 = scalar_lea.vmem %s0, %s158
          %s160 = smul.u32 2, %s20
        $region28: #{vit_encoder_forward.1} parent=23 // pred_fallthru
          _
      $region24: #{vit_encoder_forward.1} parent=5 // pred_fallthru
        _
      %p161 = scmp.le.s32.totalorder 1, %s12
      %p162 = scmp.lt.s32.totalorder %s12, 3
      %p163 = pnand %p161, %p162
      %p164 = pneg %p163
      // Predicated region
      $region29: #{vit_encoder_forward.1} parent=5 // pred_check
        _
      $region30: #{vit_encoder_forward.1} parent=5 // pred_check_branch
        %166 = sbr.rel (%p163) target = $region32
      $region31: #{vit_encoder_forward.1} parent=5 // pred_region
        %s167 = ssub.s32 %s12, 1
        %s168 = smul.u32 2, %s22
        %p169 = scmp.lt.s32.totalorder %s21, 1
        %s170 = scalar_select %p169, %s21, 1
        %p171 = scmp.lt.s32.totalorder %s168, 1
        %s172 = scalar_select %p171, %s168, 1
        %s173 = smul.addr %s172, 2
        %s174 = smul.addr %s170, 4
        %s175 = sadd.s32 %s173, %s174
        %s176 = smul.addr %s175, 4
        %s177 = scalar_lea.vmem %s0, %s176
        %p178 = pneg %p52
        %p179 = pneg %p49
        %p180 = pneg %p73
        %p181 = pneg %p70
        %p182 = pneg %p94
        %p183 = pneg %p91
        %p184 = pneg %p122
        %p185 = pneg %p119
        %s186 = sand.u32 %s109, 1
        %s187 = scalar_lea.sflag [#allocation3], %s186
        %s188 = sand.u32 %s109, 1
        %s189 = smul.addr %s188, 16
        %s190 = scalar_lea.vmem [#allocation2], %s189
        %s191 = smul.u32 2, %s22
        %p192 = scmp.lt.s32.totalorder %s21, 1
        %s193 = scalar_select %p192, %s21, 1
        %p194 = scmp.lt.s32.totalorder %s191, 1
        %s195 = scalar_select %p194, %s191, 1
        %s196 = smul.addr %s195, 2
        %s197 = smul.addr %s193, 4
        %s198 = sadd.s32 %s196, %s197
        %s199 = smul.addr %s198, 4
        %s200 = scalar_lea.vmem %s0, %s199
        %s201 = smul.u32 2, %s22
        %s202 = smul.u32 2, %s22
        %v203 = vld [vmem:[%s200] sm:$0xff]
        %v204 = vld [vmem:[%s200 + $0x8] sm:$0xff]
        %v205 = vld [vmem:[%s1] sm:$0xf]
        %v206 = vld [vmem:[%s1 + $0x4] sm:$0xf]
        %v207 = vld [vmem:[%s1 + $0x8] sm:$0xf]
        %v208 = vld [vmem:[%s1 + $0xc] sm:$0xf]
        %v209 = vld [vmem:[%s1 + $0x10] sm:$0xf]
        %v210 = vld [vmem:[%s1 + $0x14] sm:$0xf]
        %v211 = vld [vmem:[%s1 + $0x18] sm:$0xf]
        %v212 = vld [vmem:[%s1 + $0x1c] sm:$0xf]
        %v213 = vld [vmem:[%s1 + $0x20] sm:$0xf]
        %v214 = vld [vmem:[%s1 + $0x24] sm:$0xf]
        %v215 = vld [vmem:[%s1 + $0x28] sm:$0xf]
        %v216 = vld [vmem:[%s1 + $0x2c] sm:$0xf]
        %v217 = vld [vmem:[%s1 + $0x30] sm:$0xf]
        %v218 = vld [vmem:[%s1 + $0x34] sm:$0xf]
        %v219 = vld [vmem:[%s1 + $0x38] sm:$0xf]
        %v220 = vld [vmem:[%s1 + $0x3c] sm:$0xf]
        %v221 = vld [vmem:[%s1 + $0x40] sm:$0xf]
        %v222 = vld [vmem:[%s1 + $0x44] sm:$0xf]
        %v223 = vld [vmem:[%s1 + $0x48] sm:$0xf]
        %v224 = vld [vmem:[%s1 + $0x4c] sm:$0xf]
        %v225 = vld [vmem:[%s1 + $0x50] sm:$0xf]
        %v226 = vld [vmem:[%s1 + $0x54] sm:$0xf]
        %v227 = vld [vmem:[%s1 + $0x58] sm:$0xf]
        %v228 = vld [vmem:[%s1 + $0x5c] sm:$0xf]
        %v229 = vld [vmem:[%s1 + $0x60] sm:$0xf]
        %v230 = vld [vmem:[%s1 + $0x64] sm:$0xf]
        %v231 = vld [vmem:[%s1 + $0x68] sm:$0xf]
        %v232 = vld [vmem:[%s1 + $0x6c] sm:$0xf]
        %v233 = vld [vmem:[%s1 + $0x70] sm:$0xf]
        %v234 = vld [vmem:[%s1 + $0x74] sm:$0xf]
        %v235 = vld [vmem:[%s1 + $0x78] sm:$0xf]
        %v236 = vld [vmem:[%s1 + $0x7c] sm:$0xf]
        %s237 = smul.u32 %s22, 16
        %s238 = scalar_lea.vmem %s2, %s237
        %v239 = vld [vmem:[%s238] sm:$0xff]
        %v240 = vld [vmem:[%s238 + $0x8] sm:$0xff]
        %v243 = vunpack.c.l.b16 %v203
        %v244 = vunpack.c.h.b16 %v203
        %v245 = vunpack.c.l.b16 %v204
        %v246 = vunpack.c.h.b16 %v204
        %v247 = vpack.c.b16 %v245, %v243
        %v248 = vpack.c.b16 %v246, %v244
        %v283 = vunpack.c.l.b16 %v205
        %v284 = vunpack.c.l.b16 %v206
        %v285 = vunpack.c.l.b16 %v207
        %v286 = vunpack.c.l.b16 %v208
        %v287 = vunpack.c.l.b16 %v209
        %v288 = vunpack.c.l.b16 %v210
        %v289 = vunpack.c.l.b16 %v211
        %v290 = vunpack.c.l.b16 %v212
        %v291 = vunpack.c.l.b16 %v213
        %v292 = vunpack.c.l.b16 %v214
        %v293 = vunpack.c.l.b16 %v215
        %v294 = vunpack.c.l.b16 %v216
        %v295 = vunpack.c.l.b16 %v217
        %v296 = vunpack.c.l.b16 %v218
        %v297 = vunpack.c.l.b16 %v219
        %v298 = vunpack.c.l.b16 %v220
        %v299 = vunpack.c.l.b16 %v221
        %v300 = vunpack.c.l.b16 %v222
        %v301 = vunpack.c.l.b16 %v223
        %v302 = vunpack.c.l.b16 %v224
        %v303 = vunpack.c.l.b16 %v225
        %v304 = vunpack.c.l.b16 %v226
        %v305 = vunpack.c.l.b16 %v227
        %v306 = vunpack.c.l.b16 %v228
        %v307 = vunpack.c.l.b16 %v229
        %v308 = vunpack.c.l.b16 %v230
        %v309 = vunpack.c.l.b16 %v231
        %v310 = vunpack.c.l.b16 %v232
        %v311 = vunpack.c.l.b16 %v233
        %v312 = vunpack.c.l.b16 %v234
        %v313 = vunpack.c.l.b16 %v235
        %v314 = vunpack.c.l.b16 %v236
        %v315 = vpack.c.b16 %v284, %v283
        %v316 = vpack.c.b16 %v286, %v285
        %v317 = vpack.c.b16 %v288, %v287
        %v318 = vpack.c.b16 %v290, %v289
        %v319 = vpack.c.b16 %v292, %v291
        %v320 = vpack.c.b16 %v294, %v293
        %v321 = vpack.c.b16 %v296, %v295
        %v322 = vpack.c.b16 %v298, %v297
        %v323 = vpack.c.b16 %v300, %v299
        %v324 = vpack.c.b16 %v302, %v301
        %v325 = vpack.c.b16 %v304, %v303
        %v326 = vpack.c.b16 %v306, %v305
        %v327 = vpack.c.b16 %v308, %v307
        %v328 = vpack.c.b16 %v310, %v309
        %v329 = vpack.c.b16 %v312, %v311
        %v330 = vpack.c.b16 %v314, %v313
        %347 = vmatpush.bf16.msra.mxu0 %v322
        %348 = vmatpush.bf16.msra.mxu0 %v321
        %349 = vmatpush.bf16.msra.mxu0 %v320
        %350 = vmatpush.bf16.msra.mxu0 %v319
        %351 = vmatpush.bf16.msra.mxu0 %v318
        %352 = vmatpush.bf16.msra.mxu0 %v317
        %353 = vmatpush.bf16.msra.mxu0 %v316
        %354 = vmatpush.bf16.msra.mxu0 %v315
        %355 = vmatmul.bf16.gmra.mxu0 %v247
        %v356 = vpop.f32.mrf.mxu0
        %v357 = vadd.f32 %v239, %v356
        %v358 = vpop.f32.mrf.mxu0
        %v359 = vadd.f32 %v240, %v358
        %360 = vdwg.mxu0
        %361 = vmatpush.bf16.msra.mxu0 %v330
        %362 = vmatpush.bf16.msra.mxu0 %v329
        %363 = vmatpush.bf16.msra.mxu0 %v328
        %364 = vmatpush.bf16.msra.mxu0 %v327
        %365 = vmatpush.bf16.msra.mxu0 %v326
        %366 = vmatpush.bf16.msra.mxu0 %v325
        %367 = vmatpush.bf16.msra.mxu0 %v324
        %368 = vmatpush.bf16.msra.mxu0 %v323
        %369 = vmatmul.bf16.gmra.mxu0 %v248
        %v370 = vpop.f32.mrf.mxu0
        %v371 = vadd.f32 %v357, %v370
        %v372 = vpop.f32.mrf.mxu0
        %v373 = vadd.f32 %v359, %v372
        %374 = vdwg.mxu0
        %vm375 = vcmask 130048
        %376 = vst.msk [vmem:[%s190] sm:$0xff] %vm375, %v371
        %377 = vst.msk [vmem:[%s190 + $0x8] sm:$0xff] %vm375, %v373
        %s378 = sand.u32 %s109, 1
        %s379 = scalar_lea.sflag [#allocation3], %s378
        %s380 = sand.u32 %s109, 1
        %s381 = smul.addr %s380, 16
        %s382 = scalar_lea.vmem [#allocation2], %s381
        // Predicated region
        $region33: #{vit_encoder_forward.1} parent=31 // pred_check
          %p383 = pneg %p119
        $region34: #{vit_encoder_forward.1} parent=31 // pred_check_branch
          %385 = sbr.rel (%p383) target = $region36
        $region35: #{vit_encoder_forward.1} parent=31 // pred_region
          %s386 = smul.u32 2, %s22
          %388 = vsyncadd %s379, 0
          %s389 = smul.addr %s21, 2
          %s390 = sadd.s32 %s386, %s389
          %s391 = smul.addr %s390, 8
          %s392 = scalar_lea.hbm %s3, %s391
          %s393 = sshll.u32 %s382, 4
          %s394 = int_to_ptr.vmem [resolvable:$true] %s393
          %s395 = sshll.u32 %s392, 4
          %s396 = int_to_ptr.hbm [resolvable:$true] %s395
          %401 = dma.vmem_to_hbm [thread:$0]  %s394, 256, %s396, %s379, 128, 128, 8
        $region36: #{vit_encoder_forward.1} parent=31 // pred_fallthru
          _
      $region32: #{vit_encoder_forward.1} parent=5 // pred_fallthru
        _
      %p402 = scmp.le.s32.totalorder 2, %s12
      // Predicated region
      $region37: #{vit_encoder_forward.1} parent=5 // pred_check
        %p403 = pneg %p402
      $region38: #{vit_encoder_forward.1} parent=5 // pred_check_branch
        %405 = sbr.rel (%p403) target = $region40
      $region39: #{vit_encoder_forward.1} parent=5 // pred_region
        %s406 = ssub.s32 %s12, 2
        // Predicated region
        $region41: #{vit_encoder_forward.1} parent=39 // pred_check
          %p407 = pneg %p125
        $region42: #{vit_encoder_forward.1} parent=39 // pred_check_branch
          %409 = sbr.rel (%p407) target = $region44
        $region43: #{vit_encoder_forward.1} parent=39 // pred_region
          %s410 = sand.u32 %s110, 1
          %s411 = scalar_lea.sflag [#allocation3], %s410
          %s412 = sand.u32 %s110, 1
          %s413 = smul.addr %s412, 16
          %s414 = scalar_lea.vmem [#allocation2], %s413
          %416 = dma.done %s411, 256
        $region44: #{vit_encoder_forward.1} parent=39 // pred_fallthru
          _
      $region40: #{vit_encoder_forward.1} parent=5 // pred_fallthru
        _
    $region6: #{vit_encoder_forward.1} parent=1 // loop_footer
      %s16 = sadd.s32 1, %s12
    $region7: #{vit_encoder_forward.1} parent=1 // loop_footer_branch
      %11 = sbr.rel target = $region3
    $region8: #{vit_encoder_forward.1} parent=1 // loop_exit
      _
    %417 = vsyncpa [#allocation3], 1
    %s418 = scalar_lea.sflag [#allocation3], 1
    %419 = vsyncpa %s418, 1

</llo_original>
